<compile_context>
chip_gen: v7x
topology: tpu7x:2x2x1
jax: 0.10.0
libtpu: 0.0.40
codegen_flags: <defaults>
</compile_context>

<pallas_src>
import functools

import jax
import jax.numpy as jnp
from jax.experimental import pallas as pl
from jax.experimental.pallas import tpu as pltpu


def _round_up(x, m):
    return ((x + m - 1) // m) * m


def _conv1x1_clamp_kernel(w_ref, b_ref, x_ref, o_ref, *, min_value):
    """w_ref: (C_out, C_in) f32 VMEM; b_ref: (C_out, 1) f32 VMEM;
    x_ref: (1, C_in, TL) VMEM; o_ref: (1, C_out, TL) VMEM (TL is the lane-dense axis)."""
    x = x_ref[0].astype(jnp.float32)                                  # (C_in, TL)
    # Contraction on the MXU (vector-extended slot) -> VALU stays free; result is already a
    # lane-dense (C_out, TL) block, so no per-channel accumulators / concat are needed.
    y = jnp.dot(w_ref[...], x, preferred_element_type=jnp.float32)   # (C_out, TL)
    y = y + b_ref[...]                                                # (C_out, 1) lane-broadcast
    o_ref[0] = jnp.maximum(y, jnp.float32(min_value)).astype(o_ref.dtype)


def _fused_small(x, w2, bias, stride, min_value):
    # Tiny-problem path: one fused XLA op beats any pallas_call fixed cost.
    N, C_in, L = x.shape
    L_out = (L - 1) // stride + 1
    x_s = jax.lax.slice(x, (0, 0, 0), (N, C_in, (L_out - 1) * stride + 1), (1, 1, stride))
    y = jnp.einsum("oc,ncl->nol", w2, x_s) + bias[None, :, None]
    return jnp.maximum(y, min_value)


def model_forward(x, weight, bias, *, stride=3, min_value=-1.7, tile_l=32768,
                  min_pallas_cols=8192, use_pallas=None):
    """x: (N, C_in, L) f32; weight: (C_out, C_in, 1); bias: (C_out,).
    Returns (N, C_out, L_out), same as torch Conv1d(C_in, C_out, 1, stride) + clamp_min."""
    N, C_in, L = x.shape
    C_out = weight.shape[0]
    L_out = (L - 1) // stride + 1
    w2 = weight[:, :, 0]                                              # (C_out, C_in)

    if use_pallas is None:
        use_pallas = (N * L_out) >= min_pallas_cols
    if not use_pallas:
        return _fused_small(x, w2, bias, stride, min_value)

    # Stride-3 subsample as a single XLA strided slice (NCL layout preserved, no transposes,
    # no pad).  allow_input_fusion lets XLA fuse this slice into the kernel's input so the
    # strided intermediate need not be materialized in HBM.
    # TODO(synk): no clean in-kernel strided *lane* load in Mosaic, so the subsample stays in
    # the (fusable) producer rather than inside the kernel.
    L_keep = (L_out - 1) * stride + 1
    x_s = jax.lax.slice(x, (0, 0, 0), (N, C_in, L_keep), (1, 1, stride))   # (N, C_in, L_out)

    # Lane tile: multiple of 128, large enough that per-step DMA time well exceeds the
    # ~0.35us grid-step overhead.  At tl=32768, double-buffered in+out blocks are ~3 MiB.
    tl = max(128, min(tile_l, _round_up(L_out, 128)))
    num_l = pl.cdiv(L_out, tl)
    if N == 1 and num_l < 2 and L_out > 128:
        # v7x megacore: guarantee >= 2 grid steps so both TensorCores get work.
        tl = _round_up(pl.cdiv(L_out, 2), 128)
        num_l = pl.cdiv(L_out, tl)

    kernel = functools.partial(_conv1x1_clamp_kernel, min_value=float(min_value))
    out = pl.pallas_call(
        kernel,
        out_shape=jax.ShapeDtypeStruct((N, C_out, L_out), x.dtype),
        grid=(N, num_l),
        in_specs=[
            pl.BlockSpec((C_out, C_in), lambda n, l: (0, 0)),      # weight (fetched once)
            pl.BlockSpec((C_out, 1), lambda n, l: (0, 0)),         # bias column
            pl.BlockSpec((1, C_in, tl), lambda n, l: (n, 0, l)),   # lane-dense x tile (ragged tail ok)
        ],
        out_specs=pl.BlockSpec((1, C_out, tl), lambda n, l: (n, 0, l)),
        compiler_params=pltpu.CompilerParams(
            dimension_semantics=("parallel", "parallel"),
            allow_input_fusion=[False, False, True],
            vmem_limit_bytes=32 * 1024 * 1024,
        ),
    )(w2, bias[:, None], x_s)
    return out


if __name__ == "__main__":
    key = jax.random.PRNGKey(0)
    k_x, k_w, k_b = jax.random.split(key, 3)

    # Shapes consistent with Conv1d(9, 2, 1, stride=3); L_out = 750 (matches the spec's 750).
    N, C_in, C_out, L = 2, 9, 2, 2250
    stride, min_value = 3, -1.7
    x = jax.random.normal(k_x, (N, C_in, L), dtype=jnp.float32)

    # Deterministic parameter init (mimics PyTorch uniform(-1/sqrt(fan_in), +)).
    bound = 1.0 / jnp.sqrt(jnp.float32(C_in * 1))
    weight = jax.random.uniform(k_w, (C_out, C_in, 1), jnp.float32, -bound, bound)
    bias = jax.random.uniform(k_b, (C_out,), jnp.float32, -bound, bound)

    # Reference (plain JAX): strided 1x1 conv + bias + clamp_min.
    L_out = (L - 1) // stride + 1
    x_ref_s = jax.lax.slice(x, (0, 0, 0), (N, C_in, (L_out - 1) * stride + 1), (1, 1, stride))
    ref = jnp.einsum("oc,ncl->nol", weight[:, :, 0], x_ref_s) + bias[None, :, None]
    ref = jnp.maximum(ref, min_value)

    # Pallas kernel path (forced: the auto-dispatcher would route this small demo shape to
    # the fused-XLA path per the crossover heuristic).
    out = jax.block_until_ready(
        model_forward(x, weight, bias, stride=stride, min_value=min_value, use_pallas=True))
    assert out.shape == (N, C_out, L_out)
    assert jnp.allclose(out, ref, atol=1e-5, rtol=1e-5)

    # Auto-dispatch (fused XLA) sanity checks.
    out_auto = jax.block_until_ready(
        model_forward(x, weight, bias, stride=stride, min_value=min_value))
    assert jnp.allclose(out_auto, ref, atol=1e-5, rtol=1e-5)

    x_small = x[:, :, :24]
    out_small = jax.block_until_ready(
        model_forward(x_small, weight, bias, stride=stride, min_value=min_value))
    assert jnp.allclose(out_small, ref[:, :, : out_small.shape[-1]], atol=1e-5, rtol=1e-5)

    print("KERNEL_OK")
</pallas_src>

<mosaic_0001>
module attributes {stable_mosaic.version = 11 : i64} {
  func.func @_conv1x1_clamp_kernel(%arg0: i32, %arg1: i32, %arg2: memref<2x9xf32, #tpu.memory_space<vmem>>, %arg3: memref<2x1xf32, #tpu.memory_space<vmem>>, %arg4: memref<1x9x768xf32, #tpu.memory_space<vmem>>, %arg5: memref<1x2x768xf32, #tpu.memory_space<vmem>>) attributes {dimension_semantics = [#tpu.dimension_semantics<parallel>, #tpu.dimension_semantics<parallel>], iteration_bounds = array<i64: 2, 1>, scalar_prefetch = 0 : i64, scratch_operands = 0 : i64, tpu.core_type = #tpu.core_type<tc>, window_params = [{pipeline_mode = #tpu.pipeline_mode<synchronous>, transform_indices = @transform_0, window_bounds = array<i64: 2, 9>}, {pipeline_mode = #tpu.pipeline_mode<synchronous>, transform_indices = @transform_1, window_bounds = array<i64: 2, 1>}, {transform_indices = @transform_2, window_bounds = array<i64: 1, 9, 768>}, {transform_indices = @transform_3, window_bounds = array<i64: 1, 2, 768>}]} {
    %c0 = arith.constant 0 : index
    %c0_0 = arith.constant 0 : index
    %c0_1 = arith.constant 0 : index
    %0 = vector.load %arg4[%c0, %c0_0, %c0_1] : memref<1x9x768xf32, #tpu.memory_space<vmem>>, vector<1x9x768xf32>
    %1 = vector.shape_cast %0 : vector<1x9x768xf32> to vector<9x768xf32>
    %c0_2 = arith.constant 0 : index
    %c0_3 = arith.constant 0 : index
    %2 = vector.load %arg2[%c0_2, %c0_3] : memref<2x9xf32, #tpu.memory_space<vmem>>, vector<2x9xf32>
    %cst = arith.constant dense<0.000000e+00> : vector<2x768xf32>
    %3 = tpu.matmul %2, %1, %cst {dimension_numbers = #tpu.dot_dimension_numbers<[1], [0], [0], [1], [0, 0, 1, 1], [], []>} : vector<2x9xf32>, vector<9x768xf32>, vector<2x768xf32> -> vector<2x768xf32>
    %c0_4 = arith.constant 0 : index
    %c0_5 = arith.constant 0 : index
    %4 = vector.load %arg3[%c0_4, %c0_5] : memref<2x1xf32, #tpu.memory_space<vmem>>, vector<2x1xf32>
    %5 = vector.broadcast %4 : vector<2x1xf32> to vector<2x768xf32>
    %6 = arith.addf %3, %5 : vector<2x768xf32>
    %cst_6 = arith.constant -1.700000e+00 : f32
    %7 = vector.broadcast %cst_6 : f32 to vector<2x768xf32>
    %8 = arith.maximumf %6, %7 : vector<2x768xf32>
    %c0_7 = arith.constant 0 : index
    %c0_8 = arith.constant 0 : index
    %c0_9 = arith.constant 0 : index
    %9 = vector.load %arg5[%c0_7, %c0_8, %c0_9] : memref<1x2x768xf32, #tpu.memory_space<vmem>>, vector<1x2x768xf32>
    %10 = vector.shape_cast %9 : vector<1x2x768xf32> to vector<2x768xf32>
    %11 = vector.shape_cast %8 : vector<2x768xf32> to vector<1x2x768xf32>
    tpu.vector_store %arg5[%c0_7, %c0_8, %c0_9], %11 {strides = array<i32>} : memref<1x2x768xf32, #tpu.memory_space<vmem>>, vector<1x2x768xf32>,
    return
  }
  func.func @transform_0(%arg0: i32, %arg1: i32) -> (i32, i32) {
    %c0_i32 = arith.constant 0 : i32
    %c0_i32_0 = arith.constant 0 : i32
    %c0_i32_1 = arith.constant 0 : i32
    return %c0_i32, %c0_i32_0 : i32, i32
  }
  func.func @transform_1(%arg0: i32, %arg1: i32) -> (i32, i32) {
    %c0_i32 = arith.constant 0 : i32
    %c0_i32_0 = arith.constant 0 : i32
    %c0_i32_1 = arith.constant 0 : i32
    return %c0_i32, %c0_i32_0 : i32, i32
  }
  func.func @transform_2(%arg0: i32, %arg1: i32) -> (i32, i32, i32) {
    %c0_i32 = arith.constant 0 : i32
    %c0_i32_0 = arith.constant 0 : i32
    return %arg0, %c0_i32, %arg1 : i32, i32, i32
  }
  func.func @transform_3(%arg0: i32, %arg1: i32) -> (i32, i32, i32) {
    %c0_i32 = arith.constant 0 : i32
    %c0_i32_0 = arith.constant 0 : i32
    return %arg0, %c0_i32, %arg1 : i32, i32, i32
  }
}

</mosaic_0001>

<llo_original>
// kernel: tpu_custom_call.1
$region0: #{tpu_custom_call.1}
  #allocation0 [shape = 'u32[]', space=smem, size = 0x4, offset = 0x4, fixed_abs, tag = 'smem constant byte address 0x4 - core index']
  #allocation1 [shape = 'u32[144,128]{1,0:T(1,128)}', space=vmem, size = 0x12000, scoped, tag = 'internal scratch']
  %s0 = inlined_call_operand.vmem [shape: f32[2,9], index: 0, kind: input, shape index: {}]
  %s1 = inlined_call_operand.vmem [shape: f32[2,1], index: 1, kind: input, shape index: {}]
  %s2 = inlined_call_operand.vmem [shape: f32[2,9,750], index: 2, kind: input, shape index: {}]
  %s3 = inlined_call_operand.hbm [shape: f32[2,2,750], index: 3, kind: output, shape index: {}]
  %s4 = sld [smem:[#allocation0]]
  $region45: #{tpu_custom_call.1} parent=0
    _
  %s6 = ssub.s32 1, %s4
  %s7 = scalar_select 0, %s6, %s4
  $region1: #{tpu_custom_call.1} parent=0
    #allocation2 [shape = 'u8[12288]{0}', space=vmem, size = 0x3000, scoped, tag = 'output window, operand 0']
    #allocation3 [shape = 's32[2]{0}', space=sflag, size = 0x8, scoped, tag = 'scoped memory for tpu_custom_call.1']
    %8 = vsyncpa [#allocation3], 0
    %s9 = scalar_lea.sflag [#allocation3], 1
    %10 = vsyncpa %s9, 0
    loop: start=0, step=1, limit=4
    $region2: #{tpu_custom_call.1} parent=1 // loop_pre_header
      _
    $region3: #{tpu_custom_call.1} parent=1 // loop_header
      %s12 = sphi 0, %s16
      %p13 = scmp.ge.s32.totalorder %s12, 4
      %s19 = sphi 0, %s31
      %s20 = sphi 0, %s27
      %s21 = sphi 0, %s19
      %s22 = sphi 0, %s20
      %s23 = sphi 0, %s21
      %s24 = sphi 0, %s22
      %s32 = sphi 0, %s32
      %s34 = sphi 0, %s32
      %s35 = sphi 0, %s34
      %s49 = sphi 0, %s35
      %s53 = sphi 0, %s53
      %s55 = sphi 0, %s53
      %s56 = sphi 0, %s55
      %s70 = sphi 0, %s56
      %s78 = sphi 0, %s80
      %s81 = sphi 0, %s78
      %s82 = sphi 0, %s81
      %s98 = sphi 0, %s82
      %s106 = sphi 0, %s108
      %s109 = sphi 0, %s106
      %s110 = sphi 0, %s109
      %s126 = sphi 0, %s110
    $region4: #{tpu_custom_call.1} parent=1 // loop_header_branch
      %15 = sbr.rel (%p13) target = $region8
    $region5: #{tpu_custom_call.1} parent=1 // loop_body
      %s17 = ssub.s32 %s12, 1
      %s18 = ssub.s32 %s12, 2
      %s25 = sadd.s32 1, %s20
      %p26 = scmp.ge.s32.totalorder %s25, 1
      %s27 = scalar_select %p26, 0, %s25
      %s28 = sadd.s32 1, %s19
      %s29 = scalar_select %p26, %s28, %s19
      %p30 = scmp.ge.s32.totalorder %s29, 2
      %s31 = scalar_select %p30, 0, %s29
      %s33 = sadd.s32 %s32, 1
      %p36 = scmp.eq.s32.totalorder %s12, 1
      %p37 = scmp.ne.s32.totalorder %s32, %s34
      %p38 = scmp.eq.s32.totalorder %s12, 0
      %p39 = por %p37, %p38
      %p40 = scmp.ne.s32.totalorder %s32, %s34
      %p41 = scmp.eq.s32.totalorder %s17, 1
      %p42 = por %p40, %p41
      %p43 = scmp.ne.s32.totalorder %s34, %s35
      %p44 = scmp.eq.s32.totalorder %s17, 0
      %p45 = por %p43, %p44
      %p46 = scmp.ne.s32.totalorder %s34, %s35
      %p47 = scmp.eq.s32.totalorder %s18, 1
      %p48 = por %p46, %p47
      %p50 = scmp.ne.s32.totalorder %s35, %s49
      %p51 = scmp.eq.s32.totalorder %s18, 0
      %p52 = por %p50, %p51
      %s54 = sadd.s32 %s53, 1
      %p57 = scmp.eq.s32.totalorder %s12, 1
      %p58 = scmp.ne.s32.totalorder %s53, %s55
      %p59 = scmp.eq.s32.totalorder %s12, 0
      %p60 = por %p58, %p59
      %p61 = scmp.ne.s32.totalorder %s53, %s55
      %p62 = scmp.eq.s32.totalorder %s17, 1
      %p63 = por %p61, %p62
      %p64 = scmp.ne.s32.totalorder %s55, %s56
      %p65 = scmp.eq.s32.totalorder %s17, 0
      %p66 = por %p64, %p65
      %p67 = scmp.ne.s32.totalorder %s55, %s56
      %p68 = scmp.eq.s32.totalorder %s18, 1
      %p69 = por %p67, %p68
      %p71 = scmp.ne.s32.totalorder %s56, %s70
      %p72 = scmp.eq.s32.totalorder %s18, 0
      %p73 = por %p71, %p72
      %s74 = ssub.s32 %s19, %s31
      %s75 = ssub.s32 %s20, %s27
      %s76 = sor.u32 %s74, %s75
      %p77 = scmp.eq.s32.totalorder %s76, 0
      %s79 = sadd.s32 %s78, 1
      %s80 = scalar_select %p77, %s78, %s79
      %p83 = pneg %p77
      %p84 = scmp.eq.s32.totalorder %s12, 1
      %p85 = por %p83, %p84
      %p86 = scmp.ne.s32.totalorder %s78, %s81
      %p87 = scmp.eq.s32.totalorder %s12, 0
      %p88 = por %p86, %p87
      %p89 = scmp.ne.s32.totalorder %s78, %s81
      %p90 = scmp.eq.s32.totalorder %s17, 1
      %p91 = por %p89, %p90
      %p92 = scmp.ne.s32.totalorder %s81, %s82
      %p93 = scmp.eq.s32.totalorder %s17, 0
      %p94 = por %p92, %p93
      %p95 = scmp.ne.s32.totalorder %s81, %s82
      %p96 = scmp.eq.s32.totalorder %s18, 1
      %p97 = por %p95, %p96
      %p99 = scmp.ne.s32.totalorder %s82, %s98
      %p100 = scmp.eq.s32.totalorder %s18, 0
      %p101 = por %p99, %p100
      %s102 = ssub.s32 %s19, %s31
      %s103 = ssub.s32 %s20, %s27
      %s104 = sor.u32 %s102, %s103
      %p105 = scmp.eq.s32.totalorder %s104, 0
      %s107 = sadd.s32 %s106, 1
      %s108 = scalar_select %p105, %s106, %s107
      %p111 = pneg %p105
      %p112 = scmp.eq.s32.totalorder %s12, 1
      %p113 = por %p111, %p112
      %p114 = scmp.ne.s32.totalorder %s106, %s109
      %p115 = scmp.eq.s32.totalorder %s12, 0
      %p116 = por %p114, %p115
      %p117 = scmp.ne.s32.totalorder %s106, %s109
      %p118 = scmp.eq.s32.totalorder %s17, 1
      %p119 = por %p117, %p118
      %p120 = scmp.ne.s32.totalorder %s109, %s110
      %p121 = scmp.eq.s32.totalorder %s17, 0
      %p122 = por %p120, %p121
      %p123 = scmp.ne.s32.totalorder %s109, %s110
      %p124 = scmp.eq.s32.totalorder %s18, 1
      %p125 = por %p123, %p124
      %p127 = scmp.ne.s32.totalorder %s110, %s126
      %p128 = scmp.eq.s32.totalorder %s18, 0
      %p129 = por %p127, %p128
      %p130 = scmp.le.s32.totalorder 1, %s12
      %p131 = scmp.lt.s32.totalorder %s12, 3
      %p132 = pnand %p130, %p131
      %p133 = pneg %p132
      // Predicated region
      $region9: #{tpu_custom_call.1} parent=5 // pred_check
        _
      $region10: #{tpu_custom_call.1} parent=5 // pred_check_branch
        %135 = sbr.rel (%p132) target = $region12
      $region11: #{tpu_custom_call.1} parent=5 // pred_region
        %s136 = ssub.s32 %s12, 1
        // Predicated region
        $region13: #{tpu_custom_call.1} parent=11 // pred_check
          %p137 = pneg %p45
        $region14: #{tpu_custom_call.1} parent=11 // pred_check_branch
          %139 = sbr.rel (%p137) target = $region16
        $region15: #{tpu_custom_call.1} parent=11 // pred_region
          _
        $region16: #{tpu_custom_call.1} parent=11 // pred_fallthru
          _
        // Predicated region
        $region17: #{tpu_custom_call.1} parent=11 // pred_check
          %p140 = pneg %p66
        $region18: #{tpu_custom_call.1} parent=11 // pred_check_branch
          %142 = sbr.rel (%p140) target = $region20
        $region19: #{tpu_custom_call.1} parent=11 // pred_region
          _
        $region20: #{tpu_custom_call.1} parent=11 // pred_fallthru
          _
      $region12: #{tpu_custom_call.1} parent=5 // pred_fallthru
        _
      %p143 = scmp.lt.s32.totalorder %s12, 2
      // Predicated region
      $region21: #{tpu_custom_call.1} parent=5 // pred_check
        %p144 = pneg %p143
      $region22: #{tpu_custom_call.1} parent=5 // pred_check_branch
        %146 = sbr.rel (%p144) target = $region24
      $region23: #{tpu_custom_call.1} parent=5 // pred_region
        // Predicated region
        $region25: #{tpu_custom_call.1} parent=23 // pred_check
          %p147 = pneg %p88
        $region26: #{tpu_custom_call.1} parent=23 // pred_check_branch
          %149 = sbr.rel (%p147) target = $region28
        $region27: #{tpu_custom_call.1} parent=23 // pred_region
          %s150 = smul.u32 6, %s20
          %p151 = scmp.lt.s32.totalorder %s19, 1
          %s152 = scalar_select %p151, %s19, 1
          %p153 = scmp.lt.s32.totalorder %s150, 5
          %s154 = scalar_select %p153, %s150, 5
          %s155 = smul.addr %s152, 12
          %s156 = sadd.s32 %s154, %s155
          %s157 = smul.addr %s156, 8
          %s158 = scalar_lea.vmem %s2, %s157
          %s159 = smul.u32 6, %s20
        $region28: #{tpu_custom_call.1} parent=23 // pred_fallthru
          _
      $region24: #{tpu_custom_call.1} parent=5 // pred_fallthru
        _
      %p160 = scmp.le.s32.totalorder 1, %s12
      %p161 = scmp.lt.s32.totalorder %s12, 3
      %p162 = pnand %p160, %p161
      %p163 = pneg %p162
      // Predicated region
      $region29: #{tpu_custom_call.1} parent=5 // pred_check
        _
      $region30: #{tpu_custom_call.1} parent=5 // pred_check_branch
        %165 = sbr.rel (%p162) target = $region32
      $region31: #{tpu_custom_call.1} parent=5 // pred_region
        %s166 = ssub.s32 %s12, 1
        %p167 = pneg %p45
        %p168 = pneg %p42
        %p169 = pneg %p66
        %p170 = pneg %p63
        %s171 = smul.u32 6, %s22
        %p172 = scmp.lt.s32.totalorder %s21, 1
        %s173 = scalar_select %p172, %s21, 1
        %p174 = scmp.lt.s32.totalorder %s171, 5
        %s175 = scalar_select %p174, %s171, 5
        %s176 = smul.addr %s173, 12
        %s177 = sadd.s32 %s175, %s176
        %s178 = smul.addr %s177, 8
        %s179 = scalar_lea.vmem %s2, %s178
        %p180 = pneg %p94
        %p181 = pneg %p91
        %p182 = pneg %p122
        %p183 = pneg %p119
        %s184 = sand.u32 %s109, 1
        %s185 = scalar_lea.sflag [#allocation3], %s184
        %s186 = sand.u32 %s109, 1
        %s187 = smul.addr %s186, 12
        %s188 = scalar_lea.vmem [#allocation2], %s187
        %s189 = smul.u32 6, %s22
        %p190 = scmp.lt.s32.totalorder %s21, 1
        %s191 = scalar_select %p190, %s21, 1
        %p192 = scmp.lt.s32.totalorder %s189, 5
        %s193 = scalar_select %p192, %s189, 5
        %s194 = smul.addr %s191, 12
        %s195 = sadd.s32 %s193, %s194
        %s196 = smul.addr %s195, 8
        %s197 = scalar_lea.vmem %s2, %s196
        %s198 = smul.u32 6, %s22
        %s199 = smul.u32 6, %s22
        %v200 = vld [vmem:[%s197] sm:$0xff]
        %v201 = vld [vmem:[%s197 + $0x8] sm:$0xff]
        %v202 = vld [vmem:[%s197 + $0x10] sm:$0xff]
        %v203 = vld [vmem:[%s197 + $0x18] sm:$0xff]
        %v204 = vld [vmem:[%s197 + $0x20] sm:$0xff]
        %v205 = vld [vmem:[%s197 + $0x28] sm:$0xff]
        %v206 = vld [vmem:[%s197 + $0x30] sm:$0x1]
        %v207 = vld [vmem:[%s197 + $0x38] sm:$0x1]
        %v208 = vld [vmem:[%s197 + $0x40] sm:$0x1]
        %v209 = vld [vmem:[%s197 + $0x48] sm:$0x1]
        %v210 = vld [vmem:[%s197 + $0x50] sm:$0x1]
        %v211 = vld [vmem:[%s197 + $0x58] sm:$0x1]
        %v212 = vld [vmem:[%s0] sm:$0x3]
        %v213 = vld [vmem:[%s1] sm:$0x3]
        %215 = vset.pattern.permute.xlu0 0
        %216 = vperm.xlu0 %215, %v213
        %v217 = vpop.permute.xlu0 %216
        %vm219 = vcmask 72704
        %v221 = vsel %vm219, %v212, 0
        %vm223 = vcmask 1040384
        %v225 = vsel %vm223, %v206, 0
        %v228 = vsel %vm223, %v207, 0
        %v231 = vsel %vm223, %v208, 0
        %v234 = vsel %vm223, %v209, 0
        %v237 = vsel %vm223, %v210, 0
        %v240 = vsel %vm223, %v211, 0
        %242 = vmatprep.subr.mxu0 %v201
        %243 = vmatpush1.msra.mxu0 %v200
        %244 = vmatprep.subr.mxu0 %v228
        %245 = vmatpush1.msra.mxu0 %v225
        %246 = vmatprep.subr.mxu0 0.0
        %247 = vmatpush1.msra.mxu0 0.0
        %248 = vmatprep.subr.mxu0 0.0
        %249 = vmatpush1.msra.mxu0 0.0
        %250 = vmatprep.subr.mxu0 0.0
        %251 = vmatpush1.msra.mxu0 0.0
        %252 = vmatprep.subr.mxu0 0.0
        %253 = vmatpush1.msra.mxu0 0.0
        %254 = vmatprep.subr.mxu0 0.0
        %255 = vmatpush1.msra.mxu0 0.0
        %256 = vmatprep.subr.mxu0 0.0
        %257 = vmatpush1.msra.mxu0 0.0
        %258 = vmatprep.subr.mxu0 0.0
        %259 = vmatpush1.msra.mxu0 0.0
        %260 = vmatprep.subr.mxu0 0.0
        %261 = vmatpush1.msra.mxu0 0.0
        %262 = vmatprep.subr.mxu0 0.0
        %263 = vmatpush1.msra.mxu0 0.0
        %264 = vmatprep.subr.mxu0 0.0
        %265 = vmatpush1.msra.mxu0 0.0
        %266 = vmatprep.subr.mxu0 0.0
        %267 = vmatpush1.msra.mxu0 0.0
        %268 = vmatprep.subr.mxu0 0.0
        %269 = vmatpush1.msra.mxu0 0.0
        %270 = vmatprep.subr.mxu0 0.0
        %271 = vmatpush1.msra.mxu0 0.0
        %272 = vmatprep.subr.mxu0 0.0
        %273 = vmatpush1.msra.mxu0 0.0
        %274 = vmatprep.subr.mxu0 0.0
        %275 = vmatpush1.msra.mxu0 0.0
        %276 = vmatprep.subr.mxu0 0.0
        %277 = vmatpush1.msra.mxu0 0.0
        %278 = vmatprep.subr.mxu0 0.0
        %279 = vmatpush1.msra.mxu0 0.0
        %280 = vmatprep.subr.mxu0 0.0
        %281 = vmatpush1.msra.mxu0 0.0
        %282 = vmatprep.subr.mxu0 0.0
        %283 = vmatpush1.msra.mxu0 0.0
        %284 = vmatprep.subr.mxu0 0.0
        %285 = vmatpush1.msra.mxu0 0.0
        %286 = vmatprep.subr.mxu0 0.0
        %287 = vmatpush1.msra.mxu0 0.0
        %288 = vmatprep.subr.mxu0 0.0
        %289 = vmatpush1.msra.mxu0 0.0
        %290 = vmatprep.subr.mxu0 0.0
        %291 = vmatpush1.msra.mxu0 0.0
        %292 = vmatprep.subr.mxu0 0.0
        %293 = vmatpush1.msra.mxu0 0.0
        %294 = vmatprep.subr.mxu0 0.0
        %295 = vmatpush1.msra.mxu0 0.0
        %296 = vmatprep.subr.mxu0 0.0
        %297 = vmatpush1.msra.mxu0 0.0
        %298 = vmatprep.subr.mxu0 0.0
        %299 = vmatpush1.msra.mxu0 0.0
        %300 = vmatprep.subr.mxu0 0.0
        %301 = vmatpush1.msra.mxu0 0.0
        %302 = vmatprep.subr.mxu0 0.0
        %303 = vmatpush1.msra.mxu0 0.0
        %304 = vmatprep.subr.mxu0 0.0
        %305 = vmatpush1.msra.mxu0 0.0
        %306 = vmatprep.mubr.f32.mxu0 0.0
        %307 = vmatmul.mubr.f32.gmra.mrb[0].mxu0 %v221
        %v308 = vpop.f32.mrb[0].mxu0
        %v309 = vadd.f32 %v217, %v308
        %v310 = vpop.f32.mrb[0].mxu0
        %v311 = vadd.f32 %v217, %v310
        %312 = vdwg.mxu0
        %313 = vmatprep.subr.mxu0 %v203
        %314 = vmatpush1.msra.mxu0 %v202
        %315 = vmatprep.subr.mxu0 %v234
        %316 = vmatpush1.msra.mxu0 %v231
        %317 = vmatprep.subr.mxu0 0.0
        %318 = vmatpush1.msra.mxu0 0.0
        %319 = vmatprep.subr.mxu0 0.0
        %320 = vmatpush1.msra.mxu0 0.0
        %321 = vmatprep.subr.mxu0 0.0
        %322 = vmatpush1.msra.mxu0 0.0
        %323 = vmatprep.subr.mxu0 0.0
        %324 = vmatpush1.msra.mxu0 0.0
        %325 = vmatprep.subr.mxu0 0.0
        %326 = vmatpush1.msra.mxu0 0.0
        %327 = vmatprep.subr.mxu0 0.0
        %328 = vmatpush1.msra.mxu0 0.0
        %329 = vmatprep.subr.mxu0 0.0
        %330 = vmatpush1.msra.mxu0 0.0
        %331 = vmatprep.subr.mxu0 0.0
        %332 = vmatpush1.msra.mxu0 0.0
        %333 = vmatprep.subr.mxu0 0.0
        %334 = vmatpush1.msra.mxu0 0.0
        %335 = vmatprep.subr.mxu0 0.0
        %336 = vmatpush1.msra.mxu0 0.0
        %337 = vmatprep.subr.mxu0 0.0
        %338 = vmatpush1.msra.mxu0 0.0
        %339 = vmatprep.subr.mxu0 0.0
        %340 = vmatpush1.msra.mxu0 0.0
        %341 = vmatprep.subr.mxu0 0.0
        %342 = vmatpush1.msra.mxu0 0.0
        %343 = vmatprep.subr.mxu0 0.0
        %344 = vmatpush1.msra.mxu0 0.0
        %345 = vmatprep.subr.mxu0 0.0
        %346 = vmatpush1.msra.mxu0 0.0
        %347 = vmatprep.subr.mxu0 0.0
        %348 = vmatpush1.msra.mxu0 0.0
        %349 = vmatprep.subr.mxu0 0.0
        %350 = vmatpush1.msra.mxu0 0.0
        %351 = vmatprep.subr.mxu0 0.0
        %352 = vmatpush1.msra.mxu0 0.0
        %353 = vmatprep.subr.mxu0 0.0
        %354 = vmatpush1.msra.mxu0 0.0
        %355 = vmatprep.subr.mxu0 0.0
        %356 = vmatpush1.msra.mxu0 0.0
        %357 = vmatprep.subr.mxu0 0.0
        %358 = vmatpush1.msra.mxu0 0.0
        %359 = vmatprep.subr.mxu0 0.0
        %360 = vmatpush1.msra.mxu0 0.0
        %361 = vmatprep.subr.mxu0 0.0
        %362 = vmatpush1.msra.mxu0 0.0
        %363 = vmatprep.subr.mxu0 0.0
        %364 = vmatpush1.msra.mxu0 0.0
        %365 = vmatprep.subr.mxu0 0.0
        %366 = vmatpush1.msra.mxu0 0.0
        %367 = vmatprep.subr.mxu0 0.0
        %368 = vmatpush1.msra.mxu0 0.0
        %369 = vmatprep.subr.mxu0 0.0
        %370 = vmatpush1.msra.mxu0 0.0
        %371 = vmatprep.subr.mxu0 0.0
        %372 = vmatpush1.msra.mxu0 0.0
        %373 = vmatprep.subr.mxu0 0.0
        %374 = vmatpush1.msra.mxu0 0.0
        %375 = vmatprep.subr.mxu0 0.0
        %376 = vmatpush1.msra.mxu0 0.0
        %377 = vmatprep.mubr.f32.mxu0 0.0
        %378 = vmatmul.mubr.f32.gmra.mrb[0].mxu0 %v221
        %v379 = vpop.f32.mrb[0].mxu0
        %v380 = vadd.f32 %v217, %v379
        %v381 = vpop.f32.mrb[0].mxu0
        %v382 = vadd.f32 %v217, %v381
        %383 = vdwg.mxu0
        %384 = vmatprep.subr.mxu0 %v205
        %385 = vmatpush1.msra.mxu0 %v204
        %386 = vmatprep.subr.mxu0 %v240
        %387 = vmatpush1.msra.mxu0 %v237
        %388 = vmatprep.subr.mxu0 0.0
        %389 = vmatpush1.msra.mxu0 0.0
        %390 = vmatprep.subr.mxu0 0.0
        %391 = vmatpush1.msra.mxu0 0.0
        %392 = vmatprep.subr.mxu0 0.0
        %393 = vmatpush1.msra.mxu0 0.0
        %394 = vmatprep.subr.mxu0 0.0
        %395 = vmatpush1.msra.mxu0 0.0
        %396 = vmatprep.subr.mxu0 0.0
        %397 = vmatpush1.msra.mxu0 0.0
        %398 = vmatprep.subr.mxu0 0.0
        %399 = vmatpush1.msra.mxu0 0.0
        %400 = vmatprep.subr.mxu0 0.0
        %401 = vmatpush1.msra.mxu0 0.0
        %402 = vmatprep.subr.mxu0 0.0
        %403 = vmatpush1.msra.mxu0 0.0
        %404 = vmatprep.subr.mxu0 0.0
        %405 = vmatpush1.msra.mxu0 0.0
        %406 = vmatprep.subr.mxu0 0.0
        %407 = vmatpush1.msra.mxu0 0.0
        %408 = vmatprep.subr.mxu0 0.0
        %409 = vmatpush1.msra.mxu0 0.0
        %410 = vmatprep.subr.mxu0 0.0
        %411 = vmatpush1.msra.mxu0 0.0
        %412 = vmatprep.subr.mxu0 0.0
        %413 = vmatpush1.msra.mxu0 0.0
        %414 = vmatprep.subr.mxu0 0.0
        %415 = vmatpush1.msra.mxu0 0.0
        %416 = vmatprep.subr.mxu0 0.0
        %417 = vmatpush1.msra.mxu0 0.0
        %418 = vmatprep.subr.mxu0 0.0
        %419 = vmatpush1.msra.mxu0 0.0
        %420 = vmatprep.subr.mxu0 0.0
        %421 = vmatpush1.msra.mxu0 0.0
        %422 = vmatprep.subr.mxu0 0.0
        %423 = vmatpush1.msra.mxu0 0.0
        %424 = vmatprep.subr.mxu0 0.0
        %425 = vmatpush1.msra.mxu0 0.0
        %426 = vmatprep.subr.mxu0 0.0
        %427 = vmatpush1.msra.mxu0 0.0
        %428 = vmatprep.subr.mxu0 0.0
        %429 = vmatpush1.msra.mxu0 0.0
        %430 = vmatprep.subr.mxu0 0.0
        %431 = vmatpush1.msra.mxu0 0.0
        %432 = vmatprep.subr.mxu0 0.0
        %433 = vmatpush1.msra.mxu0 0.0
        %434 = vmatprep.subr.mxu0 0.0
        %435 = vmatpush1.msra.mxu0 0.0
        %436 = vmatprep.subr.mxu0 0.0
        %437 = vmatpush1.msra.mxu0 0.0
        %438 = vmatprep.subr.mxu0 0.0
        %439 = vmatpush1.msra.mxu0 0.0
        %440 = vmatprep.subr.mxu0 0.0
        %441 = vmatpush1.msra.mxu0 0.0
        %442 = vmatprep.subr.mxu0 0.0
        %443 = vmatpush1.msra.mxu0 0.0
        %444 = vmatprep.subr.mxu0 0.0
        %445 = vmatpush1.msra.mxu0 0.0
        %446 = vmatprep.subr.mxu0 0.0
        %447 = vmatpush1.msra.mxu0 0.0
        %448 = vmatprep.mubr.f32.mxu0 0.0
        %449 = vmatmul.mubr.f32.gmra.mrb[0].mxu0 %v221
        %v450 = vpop.f32.mrb[0].mxu0
        %v451 = vadd.f32 %v217, %v450
        %v452 = vpop.f32.mrb[0].mxu0
        %v453 = vadd.f32 %v217, %v452
        %454 = vdwg.mxu0
        %v455 = vmax.f32 %v309, -1.7
        %v456 = vmax.f32 %v311, -1.7
        %v457 = vmax.f32 %v380, -1.7
        %v458 = vmax.f32 %v382, -1.7
        %v459 = vmax.f32 %v451, -1.7
        %v460 = vmax.f32 %v453, -1.7
        %v467 = vcombine.low %v455, %v456
        %v468 = vcombine.low %v457, %v458
        %v470 = vunpack.c.l.s4 1983009808
        %v471 = vunpack.c.0.s8 %v470
        %v472 = vlaneseq
        %v473 = vshrl.u32 %v472, 7
        %v474 = vsub.s32 %v471, %v473
        %v475 = vrot.slane %v467, %v474
        %v477 = vunpack.c.l.s4 1983009808
        %v478 = vunpack.c.0.s8 %v477
        %v479 = vlaneseq
        %v480 = vshrl.u32 %v479, 7
        %v481 = vsub.s32 %v478, %v480
        %v482 = vrot.slane %v468, %v481
        %v483 = vcombine.low %v475, %v482
        %v484 = vcombine.low %v459, %v460
        %v486 = vunpack.c.l.s4 1983009808
        %v487 = vunpack.c.0.s8 %v486
        %v488 = vlaneseq
        %v489 = vshrl.u32 %v488, 7
        %v490 = vsub.s32 %v487, %v489
        %v491 = vrot.slane %v484, %v490
        %494 = vst [vmem:[%s188] sm:$0xff] %v483
        %495 = vst [vmem:[%s188 + $0x8] sm:$0xf] %v491
        %s496 = sand.u32 %s109, 1
        %s497 = scalar_lea.sflag [#allocation3], %s496
        %s498 = sand.u32 %s109, 1
        %s499 = smul.addr %s498, 12
        %s500 = scalar_lea.vmem [#allocation2], %s499
        // Predicated region
        $region33: #{tpu_custom_call.1} parent=31 // pred_check
          %p501 = pneg %p119
        $region34: #{tpu_custom_call.1} parent=31 // pred_check_branch
          %503 = sbr.rel (%p501) target = $region36
        $region35: #{tpu_custom_call.1} parent=31 // pred_region
          %s504 = smul.u32 6, %s22
          %s506 = ssub.s32 192, 192
          %507 = vsyncadd %s497, %s506
          %s508 = smul.addr %s21, 6
          %s509 = sadd.s32 %s504, %s508
          %s510 = smul.addr %s509, 32
          %s511 = scalar_lea.hbm %s3, %s510
          %s513 = sshll.u32 %s500, 4
          %s514 = int_to_ptr.vmem [resolvable:$true] %s513
          %516 = dma.vmem_to_hbm [thread:$0]  %s514, 192, %s511, %s497
        $region36: #{tpu_custom_call.1} parent=31 // pred_fallthru
          _
      $region32: #{tpu_custom_call.1} parent=5 // pred_fallthru
        _
      %p517 = scmp.le.s32.totalorder 2, %s12
      // Predicated region
      $region37: #{tpu_custom_call.1} parent=5 // pred_check
        %p518 = pneg %p517
      $region38: #{tpu_custom_call.1} parent=5 // pred_check_branch
        %520 = sbr.rel (%p518) target = $region40
      $region39: #{tpu_custom_call.1} parent=5 // pred_region
        %s521 = ssub.s32 %s12, 2
        // Predicated region
        $region41: #{tpu_custom_call.1} parent=39 // pred_check
          %p522 = pneg %p125
        $region42: #{tpu_custom_call.1} parent=39 // pred_check_branch
          %524 = sbr.rel (%p522) target = $region44
        $region43: #{tpu_custom_call.1} parent=39 // pred_region
          %s525 = sand.u32 %s110, 1
          %s526 = scalar_lea.sflag [#allocation3], %s525
          %s527 = sand.u32 %s110, 1
          %s528 = smul.addr %s527, 12
          %s529 = scalar_lea.vmem [#allocation2], %s528
          %530 = dma.done %s526, 192
        $region44: #{tpu_custom_call.1} parent=39 // pred_fallthru
          _
      $region40: #{tpu_custom_call.1} parent=5 // pred_fallthru
        _
    $region6: #{tpu_custom_call.1} parent=1 // loop_footer
      %s16 = sadd.s32 1, %s12
    $region7: #{tpu_custom_call.1} parent=1 // loop_footer_branch
      %11 = sbr.rel target = $region3
    $region8: #{tpu_custom_call.1} parent=1 // loop_exit
      _
    %531 = vsyncpa [#allocation3], 1
    %s532 = scalar_lea.sflag [#allocation3], 1
    %533 = vsyncpa %s532, 1

</llo_original>
